<compile_context>
chip_gen: v6e
topology: v6e:2x2x1
jax: 0.10.0
libtpu: 0.0.40
codegen_flags: <defaults>
</compile_context>

<pallas_src>
import functools

import jax
import jax.numpy as jnp
from jax.experimental import pallas as pl
from jax.experimental.pallas import tpu as pltpu


_LANE_CAP = 2048                 # max folded lane width (multiple of 128)
_TARGET_BLOCK_ELEMS = 1 << 20    # ~1 Mi elems / operand block: 4 MiB f32, 2 MiB bf16
_MIN_GRID_STEPS = 4              # keep both v7x TensorCores fed even at B == 1
_MAX_B_FOR_FUSED_COS = 8         # beyond this the cos stream is already amortized

# Flipped to False (once) if the local Mosaic toolchain cannot lower jnp.cos.
_FUSED_COS_OK = [True]


# ----------------------------- host-side helpers -----------------------------

def _make_cos_matrix(d_model: int, seq_len: int) -> jnp.ndarray:
    """(seq_len, d_model) f32 cos rotation matrix, as in the PyTorch module."""
    positions = jnp.arange(seq_len, dtype=jnp.float32)[:, None]             # (S, 1)
    scaling = jnp.power(
        jnp.float32(10000.0),
        jnp.arange(0, d_model, 2, dtype=jnp.float32) / jnp.float32(d_model))
    cos_half = jnp.cos(positions / scaling)                                 # (S, D/2)
    return jnp.repeat(cos_half, 2, axis=1)                                  # (S, D)


def _fold_lanes(S: int, D: int) -> int:
    """Largest k with k | S, (k*D) % 128 == 0 and k*D <= _LANE_CAP; else 1.
    Fallback k=1 (L=D) is always correct; it is only lane-sparse when D is not
    a multiple of 128 (awkward shapes)."""
    best = 1
    cand = 1
    while cand * D <= _LANE_CAP:
        if S % cand == 0 and (cand * D) % 128 == 0:
            best = cand
        cand += 1
    return best


def _choose_row_tile(R: int, L: int, B: int, target_elems: int) -> int:
    """Rows per block: the full R, or a multiple of 8 (ideally a divisor of R so
    every tile — and every store — is full width)."""
    cap = max(8, target_elems // L)                     # byte/element budget
    want_tiles = -(-_MIN_GRID_STEPS // B)               # ceil: feed 2 TCs on v7x
    if want_tiles > 1:
        cap = min(cap, max(8, R // want_tiles))
    if R <= cap:
        return R
    tr = (cap // 8) * 8
    t = tr
    while t >= 8:                                       # prefer a divisor of R
        if R % t == 0:
            return t
        t -= 8
    return tr            # ragged last tile: Pallas pads the read / masks the store


def _pick_vmem_limit() -> int:
    """Generation-aware scoped-VMEM limit (raise it on v5e/v6e, keep headroom on
    v7x whose physical VMEM is only 64 MiB)."""
    try:
        phys = int(getattr(pltpu.get_tpu_info(), "vmem_capacity_bytes", 0) or 0)
    except Exception:
        phys = 0
    if phys >= 96 * 1024 * 1024:
        return 64 * 1024 * 1024          # v5e / v6e (128 MiB physical)
    if phys >= 48 * 1024 * 1024:
        return 48 * 1024 * 1024          # v7x (64 MiB physical)
    return 32 * 1024 * 1024              # unknown: conservative default


# --------------------------------- kernels -----------------------------------

def _rope_fused_cos_kernel(x_ref, pos_ref, winv_ref, o_ref, *, ppr):
    """One (1, TR, L) block of the folded (B, R, L) view; cos computed in-kernel.

    pos_ref[0,0,l]  = l // D                  (position offset inside a view row)
    winv_ref[0,0,l] = 10000**(-(2*((l % D)//2)) / D)
    ppr             = L // D                  (positions per view row)
    """
    t = pl.program_id(0)
    x = x_ref[...].astype(jnp.float32)             # (1, TR, L)
    TR, L = x.shape[1], x.shape[2]

    # ±1-lane neighbours via XLU rolls (np.roll semantics; the wrapped lanes are
    # never selected because L and D are even).
    x_prev = pltpu.roll(x, shift=1, axis=2)        # x_prev[l] = x[l-1]
    x_next = pltpu.roll(x, shift=L - 1, axis=2)    # x_next[l] = x[l+1]

    # Lane-parity select, built once at (1, 1, L) and broadcast across rows.
    lane = jax.lax.broadcasted_iota(jnp.int32, (1, 1, L), 2)
    shifted = jnp.where((lane & 1) == 0, -x_next, x_prev)

    # cos rotation matrix on the fly (no HBM stream):
    #   position s = (t*TR + row) * ppr + (l // D);  angle = s * winv
    row = jax.lax.broadcasted_iota(jnp.int32, (1, TR, L), 1)
    s = t * (TR * ppr) + row * ppr + pos_ref[...]
    cosv = jnp.cos(s.astype(jnp.float32) * winv_ref[...])

    # Module's (buggy) forward uses sin := cos, so out = cos * (x + shifted).
    o_ref[...] = (cosv * (x + shifted)).astype(o_ref.dtype)


def _rope_streamed_cos_kernel(x_ref, cos_ref, o_ref):
    """Fallback: cos table streamed from HBM (f32), same elementwise math."""
    x = x_ref[...].astype(jnp.float32)             # (1, TR, L)
    cos = cos_ref[...]                             # f32 table block
    L = x.shape[2]
    x_prev = pltpu.roll(x, shift=1, axis=2)
    x_next = pltpu.roll(x, shift=L - 1, axis=2)
    lane = jax.lax.broadcasted_iota(jnp.int32, (1, 1, L), 2)
    shifted = jnp.where((lane & 1) == 0, -x_next, x_prev)
    o_ref[...] = (cos * (x + shifted)).astype(o_ref.dtype)


# --------------------------------- runners -----------------------------------

def _run_fused_cos(x_v, D, ppr, TR, n_row_tiles, vmem_limit):
    B, R, L = x_v.shape
    lane = jnp.arange(L, dtype=jnp.int32)
    pos_in_row = (lane // D).reshape(1, 1, L)                              # l // D
    winv = (1.0 / jnp.power(
        jnp.float32(10000.0),
        (2 * ((lane % D) // 2)).astype(jnp.float32) / jnp.float32(D)
    )).astype(jnp.float32).reshape(1, 1, L)

    kernel = functools.partial(_rope_fused_cos_kernel, ppr=ppr)
    return pl.pallas_call(
        kernel,
        out_shape=jax.ShapeDtypeStruct((B, R, L), x_v.dtype),
        grid_spec=pltpu.PrefetchScalarGridSpec(
            num_scalar_prefetch=0,
            grid=(n_row_tiles, B),
            in_specs=[
                pl.BlockSpec((1, TR, L), lambda t, b: (b, t, 0)),   # x
                pl.BlockSpec((1, 1, L), lambda t, b: (0, 0, 0)),    # pos_in_row
                pl.BlockSpec((1, 1, L), lambda t, b: (0, 0, 0)),    # winv
            ],
            out_specs=pl.BlockSpec((1, TR, L), lambda t, b: (b, t, 0)),
        ),
        compiler_params=pltpu.CompilerParams(
            dimension_semantics=("parallel", "parallel"),
            vmem_limit_bytes=vmem_limit,
        ),
    )(x_v, pos_in_row, winv)


def _run_streamed_cos(x_v, D, S, TR, n_row_tiles, vmem_limit):
    B, R, L = x_v.shape
    cos_v = _make_cos_matrix(D, S).reshape(1, R, L)        # f32, like the module
    return pl.pallas_call(
        _rope_streamed_cos_kernel,
        out_shape=jax.ShapeDtypeStruct((B, R, L), x_v.dtype),
        grid_spec=pltpu.PrefetchScalarGridSpec(
            num_scalar_prefetch=0,
            grid=(n_row_tiles, B),
            in_specs=[
                pl.BlockSpec((1, TR, L), lambda t, b: (b, t, 0)),   # x
                # cos block index only changes with t -> reused across batch steps.
                pl.BlockSpec((1, TR, L), lambda t, b: (0, t, 0)),   # cos
            ],
            out_specs=pl.BlockSpec((1, TR, L), lambda t, b: (b, t, 0)),
        ),
        compiler_params=pltpu.CompilerParams(
            dimension_semantics=("parallel", "parallel"),
            vmem_limit_bytes=vmem_limit,
        ),
    )(x_v, cos_v)


def rotary_positional_encoding(inputs: jnp.ndarray, d_model: int) -> jnp.ndarray:
    """inputs: (B, S, D) -> (B, S, D), same dtype (math in f32, like the module)."""
    B, S, D = inputs.shape
    assert D == d_model and D % 2 == 0, "d_model must match inputs and be even"

    k = _fold_lanes(S, D)              # positions per folded view row
    L = k * D
    R = (S * D) // L
    x_v = inputs.reshape(B, R, L)      # free row-major reshape

    vmem_limit = _pick_vmem_limit()
    target_elems = (_TARGET_BLOCK_ELEMS if vmem_limit >= 48 * 1024 * 1024
                    else _TARGET_BLOCK_ELEMS // 2)
    TR = _choose_row_tile(R, L, B, target_elems)
    n_row_tiles = pl.cdiv(R, TR)

    if _FUSED_COS_OK[0] and B <= _MAX_B_FOR_FUSED_COS:
        try:
            out = _run_fused_cos(x_v, D, k, TR, n_row_tiles, vmem_limit)
            return out.reshape(B, S, D)
        except Exception:
            # Most likely cause: no Mosaic lowering for cos on this toolchain.
            # Degrade (once) to the streamed-cos kernel.  Note: this graceful
            # fallback only triggers when the wrapper is called eagerly (as in
            # __main__); under an outer jit, lowering errors surface later.
            _FUSED_COS_OK[0] = False
    out = _run_streamed_cos(x_v, D, S, TR, n_row_tiles, vmem_limit)
    return out.reshape(B, S, D)


# ------------------------------- reference -----------------------------------

def _reference(inputs: jnp.ndarray, d_model: int) -> jnp.ndarray:
    """Pure-JAX mirror of the PyTorch forward (incl. the sin := cos bug).
    The torch module keeps cos / shifted in f32; the result is cast back to the
    input dtype to match the kernel's native-dtype output."""
    cos = _make_cos_matrix(d_model, inputs.shape[1])        # f32
    x = inputs.astype(jnp.float32)
    shifted = jnp.zeros_like(x)
    shifted = shifted.at[:, :, 1::2].set(x[:, :, 0::2])
    shifted = shifted.at[:, :, 0::2].set(-x[:, :, 1::2])
    return (cos[None] * x + cos[None] * shifted).astype(inputs.dtype)


if __name__ == "__main__":
    # Small f32 example with the module's (B, S, D) convention.
    batch, seq_len, d_model = 2, 8, 32
    key = jax.random.PRNGKey(0)
    x = jax.random.normal(key, (batch, seq_len, d_model), dtype=jnp.float32)

    out = jax.block_until_ready(rotary_positional_encoding(x, d_model))
    ref = _reference(x, d_model)
    assert out.shape == (batch, seq_len, d_model)
    assert out.dtype == x.dtype
    assert jnp.allclose(out, ref, atol=1e-4, rtol=1e-4)

    # bf16 path with multiple row tiles (exercises the lane-dense fold, the
    # >=4-step grid for v7x, in-kernel cos, and native-dtype HBM I/O).
    b2, s2, d2 = 2, 2048, 512
    x2 = jax.random.normal(jax.random.PRNGKey(1), (b2, s2, d2), dtype=jnp.bfloat16)
    out2 = jax.block_until_ready(rotary_positional_encoding(x2, d2))
    ref2 = _reference(x2, d2)
    assert out2.shape == x2.shape
    assert out2.dtype == jnp.bfloat16
    assert jnp.allclose(out2.astype(jnp.float32), ref2.astype(jnp.float32),
                        atol=5e-2, rtol=5e-2)

    print("KERNEL_OK")
</pallas_src>

<mosaic_0001>
module attributes {stable_mosaic.version = 11 : i64} {
  func.func @_rope_fused_cos_kernel(%arg0: i32, %arg1: i32, %arg2: memref<1x1x256xf32, #tpu.memory_space<vmem>>, %arg3: memref<1x1x256xi32, #tpu.memory_space<vmem>>, %arg4: memref<1x1x256xf32, #tpu.memory_space<vmem>>, %arg5: memref<1x1x256xf32, #tpu.memory_space<vmem>>) attributes {dimension_semantics = [#tpu.dimension_semantics<parallel>, #tpu.dimension_semantics<parallel>], iteration_bounds = array<i64: 1, 2>, scalar_prefetch = 0 : i64, scratch_operands = 0 : i64, tpu.core_type = #tpu.core_type<tc>, window_params = [{transform_indices = @transform_0, window_bounds = array<i64: 1, 1, 256>}, {pipeline_mode = #tpu.pipeline_mode<synchronous>, transform_indices = @transform_1, window_bounds = array<i64: 1, 1, 256>}, {pipeline_mode = #tpu.pipeline_mode<synchronous>, transform_indices = @transform_2, window_bounds = array<i64: 1, 1, 256>}, {transform_indices = @transform_3, window_bounds = array<i64: 1, 1, 256>}]} {
    %c0 = arith.constant 0 : index
    %c0_0 = arith.constant 0 : index
    %c0_1 = arith.constant 0 : index
    %0 = vector.load %arg2[%c0, %c0_0, %c0_1] : memref<1x1x256xf32, #tpu.memory_space<vmem>>, vector<1x1x256xf32>
    %c1_i32 = arith.constant 1 : i32
    %1 = tpu.dynamic_rotate %0 by %c1_i32 dim 2 : vector<1x1x256xf32>, i32 -> vector<1x1x256xf32>
    %c255_i32 = arith.constant 255 : i32
    %2 = tpu.dynamic_rotate %0 by %c255_i32 dim 2 : vector<1x1x256xf32>, i32 -> vector<1x1x256xf32>
    %3 = tpu.iota {dimensions = array<i32: 2>} : vector<1x1x256xi32>
    %c1_i32_2 = arith.constant 1 : i32
    %4 = vector.broadcast %c1_i32_2 : i32 to vector<1x1x256xi32>
    %5 = arith.andi %3, %4 : vector<1x1x256xi32>
    %c0_i32 = arith.constant 0 : i32
    %6 = vector.broadcast %c0_i32 : i32 to vector<1x1x256xi32>
    %7 = arith.cmpi eq, %5, %6 : vector<1x1x256xi32>
    %cst = arith.constant 0.000000e+00 : f32
    %8 = vector.broadcast %cst : f32 to vector<1x1x256xf32>
    %9 = arith.subf %8, %2 : vector<1x1x256xf32>
    %10 = arith.select %7, %9, %1 : vector<1x1x256xi1>, vector<1x1x256xf32>
    %11 = tpu.iota {dimensions = array<i32: 1>} : vector<1x1x256xi32>
    %c8_i32 = arith.constant 8 : i32
    %12 = arith.muli %arg0, %c8_i32 : i32
    %c8_i32_3 = arith.constant 8 : i32
    %13 = vector.broadcast %c8_i32_3 : i32 to vector<1x1x256xi32>
    %14 = arith.muli %11, %13 : vector<1x1x256xi32>
    %15 = vector.broadcast %12 : i32 to vector<1x1x256xi32>
    %16 = arith.addi %15, %14 : vector<1x1x256xi32>
    %c0_4 = arith.constant 0 : index
    %c0_5 = arith.constant 0 : index
    %c0_6 = arith.constant 0 : index
    %17 = vector.load %arg3[%c0_4, %c0_5, %c0_6] : memref<1x1x256xi32, #tpu.memory_space<vmem>>, vector<1x1x256xi32>
    %18 = arith.addi %16, %17 : vector<1x1x256xi32>
    %19 = arith.sitofp %18 : vector<1x1x256xi32> to vector<1x1x256xf32>
    %c0_7 = arith.constant 0 : index
    %c0_8 = arith.constant 0 : index
    %c0_9 = arith.constant 0 : index
    %20 = vector.load %arg4[%c0_7, %c0_8, %c0_9] : memref<1x1x256xf32, #tpu.memory_space<vmem>>, vector<1x1x256xf32>
    %21 = arith.mulf %19, %20 : vector<1x1x256xf32>
    %22 = math.cos %21 : vector<1x1x256xf32>
    %23 = arith.addf %0, %10 : vector<1x1x256xf32>
    %24 = arith.mulf %22, %23 : vector<1x1x256xf32>
    %c0_10 = arith.constant 0 : index
    %c0_11 = arith.constant 0 : index
    %c0_12 = arith.constant 0 : index
    %25 = vector.load %arg5[%c0_10, %c0_11, %c0_12] : memref<1x1x256xf32, #tpu.memory_space<vmem>>, vector<1x1x256xf32>
    tpu.vector_store %arg5[%c0_10, %c0_11, %c0_12], %24 {strides = array<i32>} : memref<1x1x256xf32, #tpu.memory_space<vmem>>, vector<1x1x256xf32>,
    return
  }
  func.func @transform_0(%arg0: i32, %arg1: i32) -> (i32, i32, i32) {
    %c0_i32 = arith.constant 0 : i32
    %c0_i32_0 = arith.constant 0 : i32
    return %arg1, %arg0, %c0_i32 : i32, i32, i32
  }
  func.func @transform_1(%arg0: i32, %arg1: i32) -> (i32, i32, i32) {
    %c0_i32 = arith.constant 0 : i32
    %c0_i32_0 = arith.constant 0 : i32
    %c0_i32_1 = arith.constant 0 : i32
    %c0_i32_2 = arith.constant 0 : i32
    return %c0_i32, %c0_i32_0, %c0_i32_1 : i32, i32, i32
  }
  func.func @transform_2(%arg0: i32, %arg1: i32) -> (i32, i32, i32) {
    %c0_i32 = arith.constant 0 : i32
    %c0_i32_0 = arith.constant 0 : i32
    %c0_i32_1 = arith.constant 0 : i32
    %c0_i32_2 = arith.constant 0 : i32
    return %c0_i32, %c0_i32_0, %c0_i32_1 : i32, i32, i32
  }
  func.func @transform_3(%arg0: i32, %arg1: i32) -> (i32, i32, i32) {
    %c0_i32 = arith.constant 0 : i32
    %c0_i32_0 = arith.constant 0 : i32
    return %arg1, %arg0, %c0_i32 : i32, i32, i32
  }
}

module attributes {stable_mosaic.version = 11 : i64} {
  func.func @_rope_streamed_cos_kernel(%arg0: i32, %arg1: i32, %arg2: memref<1x1x256xf32, #tpu.memory_space<vmem>>, %arg3: memref<1x1x256xf32, #tpu.memory_space<vmem>>, %arg4: memref<1x1x256xf32, #tpu.memory_space<vmem>>) attributes {dimension_semantics = [#tpu.dimension_semantics<parallel>, #tpu.dimension_semantics<parallel>], iteration_bounds = array<i64: 1, 2>, scalar_prefetch = 0 : i64, scratch_operands = 0 : i64, tpu.core_type = #tpu.core_type<tc>, window_params = [{transform_indices = @transform_0, window_bounds = array<i64: 1, 1, 256>}, {transform_indices = @transform_1, window_bounds = array<i64: 1, 1, 256>}, {transform_indices = @transform_2, window_bounds = array<i64: 1, 1, 256>}]} {
    %c0 = arith.constant 0 : index
    %c0_0 = arith.constant 0 : index
    %c0_1 = arith.constant 0 : index
    %0 = vector.load %arg2[%c0, %c0_0, %c0_1] : memref<1x1x256xf32, #tpu.memory_space<vmem>>, vector<1x1x256xf32>
    %c0_2 = arith.constant 0 : index
    %c0_3 = arith.constant 0 : index
    %c0_4 = arith.constant 0 : index
    %1 = vector.load %arg3[%c0_2, %c0_3, %c0_4] : memref<1x1x256xf32, #tpu.memory_space<vmem>>, vector<1x1x256xf32>
    %c1_i32 = arith.constant 1 : i32
    %2 = tpu.dynamic_rotate %0 by %c1_i32 dim 2 : vector<1x1x256xf32>, i32 -> vector<1x1x256xf32>
    %c255_i32 = arith.constant 255 : i32
    %3 = tpu.dynamic_rotate %0 by %c255_i32 dim 2 : vector<1x1x256xf32>, i32 -> vector<1x1x256xf32>
    %4 = tpu.iota {dimensions = array<i32: 2>} : vector<1x1x256xi32>
    %c1_i32_5 = arith.constant 1 : i32
    %5 = vector.broadcast %c1_i32_5 : i32 to vector<1x1x256xi32>
    %6 = arith.andi %4, %5 : vector<1x1x256xi32>
    %c0_i32 = arith.constant 0 : i32
    %7 = vector.broadcast %c0_i32 : i32 to vector<1x1x256xi32>
    %8 = arith.cmpi eq, %6, %7 : vector<1x1x256xi32>
    %cst = arith.constant 0.000000e+00 : f32
    %9 = vector.broadcast %cst : f32 to vector<1x1x256xf32>
    %10 = arith.subf %9, %3 : vector<1x1x256xf32>
    %11 = arith.select %8, %10, %2 : vector<1x1x256xi1>, vector<1x1x256xf32>
    %12 = arith.addf %0, %11 : vector<1x1x256xf32>
    %13 = arith.mulf %1, %12 : vector<1x1x256xf32>
    %c0_6 = arith.constant 0 : index
    %c0_7 = arith.constant 0 : index
    %c0_8 = arith.constant 0 : index
    %14 = vector.load %arg4[%c0_6, %c0_7, %c0_8] : memref<1x1x256xf32, #tpu.memory_space<vmem>>, vector<1x1x256xf32>
    tpu.vector_store %arg4[%c0_6, %c0_7, %c0_8], %13 {strides = array<i32>} : memref<1x1x256xf32, #tpu.memory_space<vmem>>, vector<1x1x256xf32>,
    return
  }
  func.func @transform_0(%arg0: i32, %arg1: i32) -> (i32, i32, i32) {
    %c0_i32 = arith.constant 0 : i32
    %c0_i32_0 = arith.constant 0 : i32
    return %arg1, %arg0, %c0_i32 : i32, i32, i32
  }
  func.func @transform_1(%arg0: i32, %arg1: i32) -> (i32, i32, i32) {
    %c0_i32 = arith.constant 0 : i32
    %c0_i32_0 = arith.constant 0 : i32
    %c0_i32_1 = arith.constant 0 : i32
    return %c0_i32, %arg0, %c0_i32_0 : i32, i32, i32
  }
  func.func @transform_2(%arg0: i32, %arg1: i32) -> (i32, i32, i32) {
    %c0_i32 = arith.constant 0 : i32
    %c0_i32_0 = arith.constant 0 : i32
    return %arg1, %arg0, %c0_i32 : i32, i32, i32
  }
}

</mosaic_0001>

<llo_original>
// kernel: tpu_custom_call.1
$region0: #{tpu_custom_call.1}
  #allocation0 [shape = 'u32[]', space=smem, size = 0x4, offset = 0x4, fixed_abs, tag = 'smem constant byte address 0x4 - core index']
  #allocation1 [shape = 'u32[144,128]{1,0:T(1,128)}', space=vmem, size = 0x12000, scoped, tag = 'internal scratch']
  %s0 = inlined_call_operand.hbm [shape: f32[2,1,256], index: 0, kind: input, shape index: {}]
  %s1 = inlined_call_operand.hbm [shape: s32[1,1,256], index: 1, kind: input, shape index: {}]
  %s2 = inlined_call_operand.vmem [shape: f32[1,1,256], index: 2, kind: input, shape index: {}]
  %s3 = inlined_call_operand.hbm [shape: f32[2,1,256], index: 3, kind: output, shape index: {}]
  %s4 = sld [smem:[#allocation0]]
  $region53: #{tpu_custom_call.1} parent=0
    _
  %s6 = ssub.s32 1, %s4
  %s7 = scalar_select 0, %s6, %s4
  $region1: #{tpu_custom_call.1} parent=0
    #allocation2 [shape = 'u8[2048]{0}', space=vmem, size = 0x800, scoped, tag = 'input window, operand 0']
    #allocation3 [shape = 's32[2]{0}', space=sflag, size = 0x8, scoped, tag = 'scoped memory for tpu_custom_call.1']
    #allocation4 [shape = 's32[2]{0}', space=sflag, size = 0x8, scoped, tag = 'scoped memory for tpu_custom_call.1']
    #allocation5 [shape = 'u8[1024]{0}', space=vmem, size = 0x400, scoped, tag = 'input window, operand 1, single buffered']
    #allocation6 [shape = 's32[1]{0}', space=sflag, size = 0x4, scoped, tag = 'scoped memory for tpu_custom_call.1']
    #allocation7 [shape = 'u8[2048]{0}', space=vmem, size = 0x800, scoped, tag = 'output window, operand 0']
    %8 = vsyncpa [#allocation3], 0
    %s9 = scalar_lea.sflag [#allocation3], 1
    %10 = vsyncpa %s9, 0
    %11 = vsyncpa [#allocation6], 0
    %12 = vsyncpa [#allocation4], 0
    %s13 = scalar_lea.sflag [#allocation4], 1
    %14 = vsyncpa %s13, 0
    loop: start=0, step=1, limit=4
    $region2: #{tpu_custom_call.1} parent=1 // loop_pre_header
      _
    $region3: #{tpu_custom_call.1} parent=1 // loop_header
      %s16 = sphi 0, %s20
      %p17 = scmp.ge.s32.totalorder %s16, 4
      %s23 = sphi 0, %s35
      %s24 = sphi 0, %s31
      %s25 = sphi 0, %s23
      %s26 = sphi 0, %s24
      %s27 = sphi 0, %s25
      %s28 = sphi 0, %s26
      %s40 = sphi 0, %s42
      %s43 = sphi 0, %s40
      %s44 = sphi 0, %s43
      %s60 = sphi 0, %s44
      %s64 = sphi 0, %s64
      %s66 = sphi 0, %s64
      %s67 = sphi 0, %s66
      %s81 = sphi 0, %s67
      %s85 = sphi 0, %s85
      %s87 = sphi 0, %s85
      %s88 = sphi 0, %s87
      %s102 = sphi 0, %s88
      %s110 = sphi 0, %s112
      %s113 = sphi 0, %s110
      %s114 = sphi 0, %s113
      %s130 = sphi 0, %s114
    $region4: #{tpu_custom_call.1} parent=1 // loop_header_branch
      %19 = sbr.rel (%p17) target = $region8
    $region5: #{tpu_custom_call.1} parent=1 // loop_body
      %s21 = ssub.s32 %s16, 1
      %s22 = ssub.s32 %s16, 2
      %s29 = sadd.s32 1, %s24
      %p30 = scmp.ge.s32.totalorder %s29, 2
      %s31 = scalar_select %p30, 0, %s29
      %s32 = sadd.s32 1, %s23
      %s33 = scalar_select %p30, %s32, %s23
      %p34 = scmp.ge.s32.totalorder %s33, 1
      %s35 = scalar_select %p34, 0, %s33
      %s36 = ssub.s32 %s24, %s31
      %s37 = ssub.s32 %s23, %s35
      %s38 = sor.u32 %s36, %s37
      %p39 = scmp.eq.s32.totalorder %s38, 0
      %s41 = sadd.s32 %s40, 1
      %s42 = scalar_select %p39, %s40, %s41
      %p45 = pneg %p39
      %p46 = scmp.eq.s32.totalorder %s16, 1
      %p47 = por %p45, %p46
      %p48 = scmp.ne.s32.totalorder %s40, %s43
      %p49 = scmp.eq.s32.totalorder %s16, 0
      %p50 = por %p48, %p49
      %p51 = scmp.ne.s32.totalorder %s40, %s43
      %p52 = scmp.eq.s32.totalorder %s21, 1
      %p53 = por %p51, %p52
      %p54 = scmp.ne.s32.totalorder %s43, %s44
      %p55 = scmp.eq.s32.totalorder %s21, 0
      %p56 = por %p54, %p55
      %p57 = scmp.ne.s32.totalorder %s43, %s44
      %p58 = scmp.eq.s32.totalorder %s22, 1
      %p59 = por %p57, %p58
      %p61 = scmp.ne.s32.totalorder %s44, %s60
      %p62 = scmp.eq.s32.totalorder %s22, 0
      %p63 = por %p61, %p62
      %s65 = sadd.s32 %s64, 1
      %p68 = scmp.eq.s32.totalorder %s16, 1
      %p69 = scmp.ne.s32.totalorder %s64, %s66
      %p70 = scmp.eq.s32.totalorder %s16, 0
      %p71 = por %p69, %p70
      %p72 = scmp.ne.s32.totalorder %s64, %s66
      %p73 = scmp.eq.s32.totalorder %s21, 1
      %p74 = por %p72, %p73
      %p75 = scmp.ne.s32.totalorder %s66, %s67
      %p76 = scmp.eq.s32.totalorder %s21, 0
      %p77 = por %p75, %p76
      %p78 = scmp.ne.s32.totalorder %s66, %s67
      %p79 = scmp.eq.s32.totalorder %s22, 1
      %p80 = por %p78, %p79
      %p82 = scmp.ne.s32.totalorder %s67, %s81
      %p83 = scmp.eq.s32.totalorder %s22, 0
      %p84 = por %p82, %p83
      %s86 = sadd.s32 %s85, 1
      %p89 = scmp.eq.s32.totalorder %s16, 1
      %p90 = scmp.ne.s32.totalorder %s85, %s87
      %p91 = scmp.eq.s32.totalorder %s16, 0
      %p92 = por %p90, %p91
      %p93 = scmp.ne.s32.totalorder %s85, %s87
      %p94 = scmp.eq.s32.totalorder %s21, 1
      %p95 = por %p93, %p94
      %p96 = scmp.ne.s32.totalorder %s87, %s88
      %p97 = scmp.eq.s32.totalorder %s21, 0
      %p98 = por %p96, %p97
      %p99 = scmp.ne.s32.totalorder %s87, %s88
      %p100 = scmp.eq.s32.totalorder %s22, 1
      %p101 = por %p99, %p100
      %p103 = scmp.ne.s32.totalorder %s88, %s102
      %p104 = scmp.eq.s32.totalorder %s22, 0
      %p105 = por %p103, %p104
      %s106 = ssub.s32 %s24, %s31
      %s107 = ssub.s32 %s23, %s35
      %s108 = sor.u32 %s106, %s107
      %p109 = scmp.eq.s32.totalorder %s108, 0
      %s111 = sadd.s32 %s110, 1
      %s112 = scalar_select %p109, %s110, %s111
      %p115 = pneg %p109
      %p116 = scmp.eq.s32.totalorder %s16, 1
      %p117 = por %p115, %p116
      %p118 = scmp.ne.s32.totalorder %s110, %s113
      %p119 = scmp.eq.s32.totalorder %s16, 0
      %p120 = por %p118, %p119
      %p121 = scmp.ne.s32.totalorder %s110, %s113
      %p122 = scmp.eq.s32.totalorder %s21, 1
      %p123 = por %p121, %p122
      %p124 = scmp.ne.s32.totalorder %s113, %s114
      %p125 = scmp.eq.s32.totalorder %s21, 0
      %p126 = por %p124, %p125
      %p127 = scmp.ne.s32.totalorder %s113, %s114
      %p128 = scmp.eq.s32.totalorder %s22, 1
      %p129 = por %p127, %p128
      %p131 = scmp.ne.s32.totalorder %s114, %s130
      %p132 = scmp.eq.s32.totalorder %s22, 0
      %p133 = por %p131, %p132
      %p134 = scmp.le.s32.totalorder 1, %s16
      %p135 = scmp.lt.s32.totalorder %s16, 3
      %p136 = pnand %p134, %p135
      %p137 = pneg %p136
      // Predicated region
      $region9: #{tpu_custom_call.1} parent=5 // pred_check
        _
      $region10: #{tpu_custom_call.1} parent=5 // pred_check_branch
        %139 = sbr.rel (%p136) target = $region12
      $region11: #{tpu_custom_call.1} parent=5 // pred_region
        %s140 = ssub.s32 %s16, 1
        // Predicated region
        $region13: #{tpu_custom_call.1} parent=11 // pred_check
          %p141 = pneg %p77
        $region14: #{tpu_custom_call.1} parent=11 // pred_check_branch
          %143 = sbr.rel (%p141) target = $region16
        $region15: #{tpu_custom_call.1} parent=11 // pred_region
          %s145 = ssub.s32 32, 32
          %146 = vsyncadd [#allocation6], %s145
          %s148 = sshll.u32 [#allocation5], 4
          %s149 = int_to_ptr.vmem [resolvable:$true] %s148
          %151 = dma.hbm_to_vmem [thread:$0]  %s1, 32, %s149, [#allocation6]
        $region16: #{tpu_custom_call.1} parent=11 // pred_fallthru
          _
        // Predicated region
        $region17: #{tpu_custom_call.1} parent=11 // pred_check
          %p152 = pneg %p98
        $region18: #{tpu_custom_call.1} parent=11 // pred_check_branch
          %154 = sbr.rel (%p152) target = $region20
        $region19: #{tpu_custom_call.1} parent=11 // pred_region
          _
        $region20: #{tpu_custom_call.1} parent=11 // pred_fallthru
          _
      $region12: #{tpu_custom_call.1} parent=5 // pred_fallthru
        _
      %p155 = scmp.lt.s32.totalorder %s16, 2
      // Predicated region
      $region21: #{tpu_custom_call.1} parent=5 // pred_check
        %p156 = pneg %p155
      $region22: #{tpu_custom_call.1} parent=5 // pred_check_branch
        %158 = sbr.rel (%p156) target = $region24
      $region23: #{tpu_custom_call.1} parent=5 // pred_region
        // Predicated region
        $region25: #{tpu_custom_call.1} parent=23 // pred_check
          %p159 = pneg %p50
        $region26: #{tpu_custom_call.1} parent=23 // pred_check_branch
          %161 = sbr.rel (%p159) target = $region28
        $region27: #{tpu_custom_call.1} parent=23 // pred_region
          %s162 = sand.u32 %s40, 1
          %s163 = scalar_lea.sflag [#allocation3], %s162
          %s164 = sand.u32 %s40, 1
          %s165 = smul.addr %s164, 2
          %s166 = scalar_lea.vmem [#allocation2], %s165
          %s168 = ssub.s32 32, 32
          %169 = vsyncadd %s163, %s168
          %s170 = smul.addr %s23, 2
          %s171 = smul.addr %s24, 2
          %s172 = sadd.s32 %s170, %s171
          %s173 = smul.addr %s172, 16
          %s174 = scalar_lea.hbm %s0, %s173
          %s176 = sshll.u32 %s166, 4
          %s177 = int_to_ptr.vmem [resolvable:$true] %s176
          %179 = dma.hbm_to_vmem [thread:$0]  %s174, 32, %s177, %s163
        $region28: #{tpu_custom_call.1} parent=23 // pred_fallthru
          _
      $region24: #{tpu_custom_call.1} parent=5 // pred_fallthru
        _
      %p180 = scmp.le.s32.totalorder 1, %s16
      %p181 = scmp.lt.s32.totalorder %s16, 3
      %p182 = pnand %p180, %p181
      %p183 = pneg %p182
      // Predicated region
      $region29: #{tpu_custom_call.1} parent=5 // pred_check
        _
      $region30: #{tpu_custom_call.1} parent=5 // pred_check_branch
        %185 = sbr.rel (%p182) target = $region32
      $region31: #{tpu_custom_call.1} parent=5 // pred_region
        %s186 = ssub.s32 %s16, 1
        %s187 = sand.u32 %s43, 1
        %s188 = scalar_lea.sflag [#allocation3], %s187
        %s189 = sand.u32 %s43, 1
        %s190 = smul.addr %s189, 2
        %s191 = scalar_lea.vmem [#allocation2], %s190
        // Predicated region
        $region33: #{tpu_custom_call.1} parent=31 // pred_check
          %p192 = pneg %p56
        $region34: #{tpu_custom_call.1} parent=31 // pred_check_branch
          %194 = sbr.rel (%p192) target = $region36
        $region35: #{tpu_custom_call.1} parent=31 // pred_region
          %195 = dma.done %s188, 32
        $region36: #{tpu_custom_call.1} parent=31 // pred_fallthru
          _
        // Predicated region
        $region37: #{tpu_custom_call.1} parent=31 // pred_check
          %p196 = pneg %p77
        $region38: #{tpu_custom_call.1} parent=31 // pred_check_branch
          %198 = sbr.rel (%p196) target = $region40
        $region39: #{tpu_custom_call.1} parent=31 // pred_region
          %199 = dma.done [#allocation6], 32
        $region40: #{tpu_custom_call.1} parent=31 // pred_fallthru
          _
        %s200 = sand.u32 %s43, 1
        %s201 = scalar_lea.sflag [#allocation3], %s200
        %s202 = sand.u32 %s43, 1
        %s203 = smul.addr %s202, 2
        %s204 = scalar_lea.vmem [#allocation2], %s203
        %p205 = pneg %p56
        %p206 = pneg %p53
        %p207 = pneg %p77
        %p208 = pneg %p74
        %p209 = pneg %p98
        %p210 = pneg %p95
        %p211 = pneg %p126
        %p212 = pneg %p123
        %s213 = sand.u32 %s113, 1
        %s214 = scalar_lea.sflag [#allocation4], %s213
        %s215 = sand.u32 %s113, 1
        %s216 = smul.addr %s215, 2
        %s217 = scalar_lea.vmem [#allocation7], %s216
        %v218 = vld [vmem:[%s191] sm:$0x3]
        %v220 = vlaneseq
        %v221 = vshrl.u32 %v220, 7
        %v222 = vsub.s32 0, %v221
        %v223 = vrot.slane %v218, %v222
        %v224 = vlaneseq
        %v225 = vshrl.u32 %v224, 7
        %v226 = vsub.s32 1, %v225
        %v227 = vrot.slane %v218, %v226
        %230 = vrot.lane.b32.xlu0 %v223, 1
        %v231 = vpop.permute.xlu0 %230
        %232 = vrot.lane.b32.xlu0 %v227, 1
        %v233 = vpop.permute.xlu0 %232
        %v234 = vlaneseq
        %v235 = vand.u32 %v234, 127
        %vm236 = vcmp.lt.s32.totalorder %v235, 1
        %v237 = vsel %vm236, %v231, %v233
        %v238 = vsel %vm236, %v233, %v231
        %239 = vrot.lane.b32.xlu0 %v223, 127
        %v240 = vpop.permute.xlu0 %239
        %241 = vrot.lane.b32.xlu0 %v227, 127
        %v242 = vpop.permute.xlu0 %241
        %vm243 = vcmp.lt.s32.totalorder %v235, 127
        %v244 = vsel %vm243, %v240, %v242
        %v245 = vsel %vm243, %v242, %v240
        %v246 = vadd.s32 %v235, 128
        %v247 = vand.u32 %v235, 1
        %v248 = vand.u32 %v246, 1
        %vm249 = vcmp.eq.s32.totalorder %v247, 0
        %vm250 = vcmp.eq.s32.totalorder %v248, 0
        %v251 = vsub.f32 0.0, %v244
        %v252 = vsub.f32 0.0, %v245
        %v253 = vsel %vm249, %v251, %v238
        %v254 = vsel %vm250, %v252, %v237
        %v255 = vlaneseq
        %v256 = vshrl.u32 %v255, 7
        %s257 = smul.u32 %s25, 8
        %v258 = vmul.u32 %v256, 8
        %v259 = vstv %s257
        %v260 = vadd.s32 %v259, %v258
        %v261 = vld [vmem:[#allocation5] sm:$0x3]
        %v262 = vlaneseq
        %v263 = vshrl.u32 %v262, 7
        %v264 = vsub.s32 0, %v263
        %v265 = vrot.slane %v261, %v264
        %v266 = vlaneseq
        %v267 = vshrl.u32 %v266, 7
        %v268 = vsub.s32 1, %v267
        %v269 = vrot.slane %v261, %v268
        %v270 = vadd.s32 %v260, %v265
        %v271 = vadd.s32 %v260, %v269
        %v272 = vcvt.s32.f32 %v270
        %v273 = vcvt.s32.f32 %v271
        %v274 = vld [vmem:[%s2] sm:$0x3]
        %v276 = vlaneseq
        %v277 = vshrl.u32 %v276, 7
        %v278 = vsub.s32 0, %v277
        %v279 = vrot.slane %v274, %v278
        %v280 = vlaneseq
        %v281 = vshrl.u32 %v280, 7
        %v282 = vsub.s32 1, %v281
        %v283 = vrot.slane %v274, %v282
        %v286 = vmul.f32 %v272, %v279
        %v287 = vmul.f32 %v273, %v283
        %v288 = vand.u32 2147483647, %v286
        %vm289 = vcmp.le.f32.partialorder %v288, 0.7853982
        %vm290 = vcmp.lt.s32.totalorder %v286, 0
        %v291 = vand.u32 %v286, 2139095040
        %v292 = vshrl.u32 %v291, 23
        %v293 = vsub.s32 %v292, 127
        %v294 = vand.u32 2147483647, %v286
        %v295 = vand.u32 %v294, 8388607
        %v296 = vor.u32 %v295, 8388608
        %v297 = vsub.s32 0, %v296
        %v298 = vadd.s32 %v293, 1
        %vm299 = vcmp.gt.s32.totalorder %v298, 0
        %v300 = vsel %vm299, %v298, 0
        %v301 = vshrl.u32 %v300, 5
        %v302 = vand.u32 %v300, 31
        %v303 = vsub.s32 32, %v302
        %v304 = vshrl.u32 683565275, %v303
        %v305 = vshll.u32 683565275, %v302
        %v306 = vshrl.u32 2475754826, %v303
        %v307 = vor.u32 %v305, %v306
        %v308 = vshll.u32 2475754826, %v302
        %v309 = vshrl.u32 2131351028, %v303
        %v310 = vor.u32 %v308, %v309
        %v311 = vshll.u32 2131351028, %v302
        %v312 = vshrl.u32 2102212464, %v303
        %v313 = vor.u32 %v311, %v312
        %v314 = vshll.u32 2102212464, %v302
        %v315 = vshrl.u32 920167782, %v303
        %v316 = vor.u32 %v314, %v315
        %v317 = vshll.u32 920167782, %v302
        %v318 = vshrl.u32 1326507024, %v303
        %v319 = vor.u32 %v317, %v318
        %vm320 = vcmp.lt.s32.totalorder %v301, 1
        %vm321 = vcmp.lt.s32.totalorder %v301, 2
        %vm322 = vcmp.lt.s32.totalorder %v301, 3
        %vm323 = vcmp.lt.s32.totalorder %v301, 4
        %v324 = vsel %vm320, %v304, %v307
        %v325 = vsel %vm323, %v313, 2102212464
        %v326 = vsel %vm322, %v310, %v325
        %v327 = vsel %vm321, %v324, %v326
        %v328 = vsel %vm320, %v307, %v310
        %v329 = vsel %vm323, %v316, 920167782
        %v330 = vsel %vm322, %v313, %v329
        %v331 = vsel %vm321, %v328, %v330
        %v332 = vsel %vm320, %v310, %v313
        %v333 = vsel %vm323, %v319, 1326507024
        %v334 = vsel %vm322, %v316, %v333
        %v335 = vsel %vm321, %v332, %v334
        %v336 = vshll.u32 %v296, 8
        %v337 = vmul.u32.u64.compose %v336, %v335
        %v338 = vextract.low.u32 %v337
        %v339 = vextract.high.u32 %v337
        %v340 = vmul.u32.u64.compose %v336, %v331
        %v341 = vextract.low.u32 %v340
        %v342 = vextract.high.u32 %v340
        %v343 = vmul.u32 %v336, %v327
        %v344 = vadd.s32 %v339, %v341
        %vm345 = vc.u32 %v339, %v341
        %v346 = vadd.s32 %v342, 1
        %v347 = vsel %vm345, %v346, %v342
        %v348 = vadd.s32 %v343, %v347
        %v349 = vadd.s32 %v348, 536870912
        %v350 = vshrl.u32 %v349, 30
        %v351 = vshll.u32 %v350, 30
        %v352 = vsub.s32 %v348, %v351
        %vm353 = vcmp.lt.s32.totalorder %v352, 0
        %v354 = vsub.s32 0, %v352
        %v355 = vsel %vm353, %v354, %v352
        %v356 = vclz %v355
        %v357 = vsub.s32 %v356, 2
        %vm358 = vcmp.gt.s32.totalorder 0, %v357
        %v359 = vsel %vm358, 0, %v357
        %v360 = vsub.s32 32, %v359
        %v361 = vshll.u32 %v352, %v359
        %v362 = vshrl.u32 %v344, %v360
        %v363 = vor.u32 %v361, %v362
        %v364 = vsub.s32 4294967266, %v359
        %v365 = vadd.s32 %v364, 127
        %v366 = vshll.u32 %v365, 23
        %v367 = vor.u32 4788187, %v366
        %v368 = vand.u32 2147483647, %v367
        %v370 = vcvt.s32.f32 %v363
        %v371 = vmul.f32 %v370, %v368
        %v372 = vxor.u32 %v371, 2147483648
        %v373 = vsel %vm290, %v372, %v371
        %v374 = vsub.s32 4, %v350
        %v375 = vsel %vm290, %v374, %v350
        %v376 = vsel %vm289, %v286, %v373
        %v377 = vsel %vm289, 0, %v375
        %v378 = vcosq.f32.pop %v376
        %v379 = vsinq.f32.pop %v376
        %vm380 = vweird.f32 %v286
        %v381 = vand.u32 %v377, 3
        %vm382 = vcmp.lt.s32.totalorder %v381, 2
        %vm383 = vcmp.eq.s32.totalorder %v381, 0
        %v384 = vxor.u32 %v379, 2147483648
        %v385 = vsel %vm383, %v378, %v384
        %vm386 = vcmp.eq.s32.totalorder %v381, 2
        %v387 = vxor.u32 %v378, 2147483648
        %v388 = vsel %vm386, %v387, %v379
        %v389 = vsel %vm382, %v385, %v388
        %v390 = vsel %vm380, nan, %v389
        %v391 = vand.u32 2147483647, %v287
        %vm392 = vcmp.le.f32.partialorder %v391, 0.7853982
        %vm393 = vcmp.lt.s32.totalorder %v287, 0
        %v394 = vand.u32 %v287, 2139095040
        %v395 = vshrl.u32 %v394, 23
        %v396 = vsub.s32 %v395, 127
        %v397 = vand.u32 2147483647, %v287
        %v398 = vand.u32 %v397, 8388607
        %v399 = vor.u32 %v398, 8388608
        %v400 = vsub.s32 0, %v399
        %v401 = vadd.s32 %v396, 1
        %vm402 = vcmp.gt.s32.totalorder %v401, 0
        %v403 = vsel %vm402, %v401, 0
        %v404 = vshrl.u32 %v403, 5
        %v405 = vand.u32 %v403, 31
        %v406 = vsub.s32 32, %v405
        %v407 = vshrl.u32 683565275, %v406
        %v408 = vshll.u32 683565275, %v405
        %v409 = vshrl.u32 2475754826, %v406
        %v410 = vor.u32 %v408, %v409
        %v411 = vshll.u32 2475754826, %v405
        %v412 = vshrl.u32 2131351028, %v406
        %v413 = vor.u32 %v411, %v412
        %v414 = vshll.u32 2131351028, %v405
        %v415 = vshrl.u32 2102212464, %v406
        %v416 = vor.u32 %v414, %v415
        %v417 = vshll.u32 2102212464, %v405
        %v418 = vshrl.u32 920167782, %v406
        %v419 = vor.u32 %v417, %v418
        %v420 = vshll.u32 920167782, %v405
        %v421 = vshrl.u32 1326507024, %v406
        %v422 = vor.u32 %v420, %v421
        %vm423 = vcmp.lt.s32.totalorder %v404, 1
        %vm424 = vcmp.lt.s32.totalorder %v404, 2
        %vm425 = vcmp.lt.s32.totalorder %v404, 3
        %vm426 = vcmp.lt.s32.totalorder %v404, 4
        %v427 = vsel %vm423, %v407, %v410
        %v428 = vsel %vm426, %v416, 2102212464
        %v429 = vsel %vm425, %v413, %v428
        %v430 = vsel %vm424, %v427, %v429
        %v431 = vsel %vm423, %v410, %v413
        %v432 = vsel %vm426, %v419, 920167782
        %v433 = vsel %vm425, %v416, %v432
        %v434 = vsel %vm424, %v431, %v433
        %v435 = vsel %vm423, %v413, %v416
        %v436 = vsel %vm426, %v422, 1326507024
        %v437 = vsel %vm425, %v419, %v436
        %v438 = vsel %vm424, %v435, %v437
        %v439 = vshll.u32 %v399, 8
        %v440 = vmul.u32.u64.compose %v439, %v438
        %v441 = vextract.low.u32 %v440
        %v442 = vextract.high.u32 %v440
        %v443 = vmul.u32.u64.compose %v439, %v434
        %v444 = vextract.low.u32 %v443
        %v445 = vextract.high.u32 %v443
        %v446 = vmul.u32 %v439, %v430
        %v447 = vadd.s32 %v442, %v444
        %vm448 = vc.u32 %v442, %v444
        %v449 = vadd.s32 %v445, 1
        %v450 = vsel %vm448, %v449, %v445
        %v451 = vadd.s32 %v446, %v450
        %v452 = vadd.s32 %v451, 536870912
        %v453 = vshrl.u32 %v452, 30
        %v454 = vshll.u32 %v453, 30
        %v455 = vsub.s32 %v451, %v454
        %vm456 = vcmp.lt.s32.totalorder %v455, 0
        %v457 = vsub.s32 0, %v455
        %v458 = vsel %vm456, %v457, %v455
        %v459 = vclz %v458
        %v460 = vsub.s32 %v459, 2
        %vm461 = vcmp.gt.s32.totalorder 0, %v460
        %v462 = vsel %vm461, 0, %v460
        %v463 = vsub.s32 32, %v462
        %v464 = vshll.u32 %v455, %v462
        %v465 = vshrl.u32 %v447, %v463
        %v466 = vor.u32 %v464, %v465
        %v467 = vsub.s32 4294967266, %v462
        %v468 = vadd.s32 %v467, 127
        %v469 = vshll.u32 %v468, 23
        %v470 = vor.u32 4788187, %v469
        %v471 = vand.u32 2147483647, %v470
        %v473 = vcvt.s32.f32 %v466
        %v474 = vmul.f32 %v473, %v471
        %v475 = vxor.u32 %v474, 2147483648
        %v476 = vsel %vm393, %v475, %v474
        %v477 = vsub.s32 4, %v453
        %v478 = vsel %vm393, %v477, %v453
        %v479 = vsel %vm392, %v287, %v476
        %v480 = vsel %vm392, 0, %v478
        %v481 = vcosq.f32.pop %v479
        %v482 = vsinq.f32.pop %v479
        %vm483 = vweird.f32 %v287
        %v484 = vand.u32 %v480, 3
        %vm485 = vcmp.lt.s32.totalorder %v484, 2
        %vm486 = vcmp.eq.s32.totalorder %v484, 0
        %v487 = vxor.u32 %v482, 2147483648
        %v488 = vsel %vm486, %v481, %v487
        %vm489 = vcmp.eq.s32.totalorder %v484, 2
        %v490 = vxor.u32 %v481, 2147483648
        %v491 = vsel %vm489, %v490, %v482
        %v492 = vsel %vm485, %v488, %v491
        %v493 = vsel %vm483, nan, %v492
        %v496 = vcombine.low %v253, %v254
        %v498 = vunpack.c.l.s4 1966171168
        %v499 = vunpack.c.0.s8 %v498
        %v500 = vlaneseq
        %v501 = vshrl.u32 %v500, 7
        %v502 = vsub.s32 %v499, %v501
        %v503 = vrot.slane %v496, %v502
        %v505 = vunpack.c.l.s4 1966171168
        %v506 = vunpack.c.0.s8 %v505
        %v507 = vlaneseq
        %v508 = vshrl.u32 %v507, 7
        %v509 = vsub.s32 %v506, %v508
        %v510 = vrot.slane %v503, %v509
        %v512 = vadd.f32 %v218, %v510
        %v514 = vlaneseq
        %v515 = vshrl.u32 %v514, 7
        %v516 = vsub.s32 0, %v515
        %v517 = vrot.slane %v512, %v516
        %v518 = vlaneseq
        %v519 = vshrl.u32 %v518, 7
        %v520 = vsub.s32 1, %v519
        %v521 = vrot.slane %v512, %v520
        %v524 = vmul.f32 %v390, %v517
        %v525 = vmul.f32 %v493, %v521
        %v528 = vcombine.low %v524, %v525
        %v530 = vunpack.c.l.s4 1966171168
        %v531 = vunpack.c.0.s8 %v530
        %v532 = vlaneseq
        %v533 = vshrl.u32 %v532, 7
        %v534 = vsub.s32 %v531, %v533
        %v535 = vrot.slane %v528, %v534
        %v537 = vunpack.c.l.s4 1966171168
        %v538 = vunpack.c.0.s8 %v537
        %v539 = vlaneseq
        %v540 = vshrl.u32 %v539, 7
        %v541 = vsub.s32 %v538, %v540
        %v542 = vrot.slane %v535, %v541
        %v544 = vlaneseq
        %vm545 = vcmp.ge.s32.totalorder %v544, 0
        %vm546 = vcmp.lt.s32.totalorder %v544, 256
        %vm547 = vmand %vm545, %vm546
        %548 = vst.msk [vmem:[%s217] sm:$0x3] %vm547, %v542
        %s549 = sand.u32 %s113, 1
        %s550 = scalar_lea.sflag [#allocation4], %s549
        %s551 = sand.u32 %s113, 1
        %s552 = smul.addr %s551, 2
        %s553 = scalar_lea.vmem [#allocation7], %s552
        // Predicated region
        $region41: #{tpu_custom_call.1} parent=31 // pred_check
          %p554 = pneg %p123
        $region42: #{tpu_custom_call.1} parent=31 // pred_check_branch
          %556 = sbr.rel (%p554) target = $region44
        $region43: #{tpu_custom_call.1} parent=31 // pred_region
          %s558 = ssub.s32 32, 32
          %559 = vsyncadd %s550, %s558
          %s560 = smul.addr %s25, 2
          %s561 = smul.addr %s26, 2
          %s562 = sadd.s32 %s560, %s561
          %s563 = smul.addr %s562, 16
          %s564 = scalar_lea.hbm %s3, %s563
          %s566 = sshll.u32 %s553, 4
          %s567 = int_to_ptr.vmem [resolvable:$true] %s566
          %569 = dma.vmem_to_hbm [thread:$0]  %s567, 32, %s564, %s550
        $region44: #{tpu_custom_call.1} parent=31 // pred_fallthru
          _
      $region32: #{tpu_custom_call.1} parent=5 // pred_fallthru
        _
      %p570 = scmp.le.s32.totalorder 2, %s16
      // Predicated region
      $region45: #{tpu_custom_call.1} parent=5 // pred_check
        %p571 = pneg %p570
      $region46: #{tpu_custom_call.1} parent=5 // pred_check_branch
        %573 = sbr.rel (%p571) target = $region48
      $region47: #{tpu_custom_call.1} parent=5 // pred_region
        %s574 = ssub.s32 %s16, 2
        // Predicated region
        $region49: #{tpu_custom_call.1} parent=47 // pred_check
          %p575 = pneg %p129
        $region50: #{tpu_custom_call.1} parent=47 // pred_check_branch
          %577 = sbr.rel (%p575) target = $region52
        $region51: #{tpu_custom_call.1} parent=47 // pred_region
          %s578 = sand.u32 %s114, 1
          %s579 = scalar_lea.sflag [#allocation4], %s578
          %s580 = sand.u32 %s114, 1
          %s581 = smul.addr %s580, 2
          %s582 = scalar_lea.vmem [#allocation7], %s581
          %583 = dma.done %s579, 32
        $region52: #{tpu_custom_call.1} parent=47 // pred_fallthru
          _
      $region48: #{tpu_custom_call.1} parent=5 // pred_fallthru
        _
    $region6: #{tpu_custom_call.1} parent=1 // loop_footer
      %s20 = sadd.s32 1, %s16
    $region7: #{tpu_custom_call.1} parent=1 // loop_footer_branch
      %15 = sbr.rel target = $region3
    $region8: #{tpu_custom_call.1} parent=1 // loop_exit
      _
    %584 = vsyncpa [#allocation3], 1
    %s585 = scalar_lea.sflag [#allocation3], 1
    %586 = vsyncpa %s585, 1
    %587 = vsyncpa [#allocation6], 1
    %588 = vsyncpa [#allocation4], 1
    %s589 = scalar_lea.sflag [#allocation4], 1
    %590 = vsyncpa %s589, 1

// kernel: tpu_custom_call.1
$region0: #{tpu_custom_call.1}
  #allocation0 [shape = 'u32[]', space=smem, size = 0x4, offset = 0x4, fixed_abs, tag = 'smem constant byte address 0x4 - core index']
  #allocation1 [shape = 'u32[144,128]{1,0:T(1,128)}', space=vmem, size = 0x12000, scoped, tag = 'internal scratch']
  %s0 = inlined_call_operand.hbm [shape: f32[2,1,256], index: 0, kind: input, shape index: {}]
  %s1 = inlined_call_operand.hbm [shape: f32[1,1,256], index: 1, kind: input, shape index: {}]
  %s2 = inlined_call_operand.hbm [shape: f32[2,1,256], index: 2, kind: output, shape index: {}]
  %s3 = sld [smem:[#allocation0]]
  $region49: #{tpu_custom_call.1} parent=0
    _
  %s5 = ssub.s32 1, %s3
  %s6 = scalar_select 0, %s5, %s3
  $region1: #{tpu_custom_call.1} parent=0
    #allocation2 [shape = 'u8[2048]{0}', space=vmem, size = 0x800, scoped, tag = 'input window, operand 0']
    #allocation3 [shape = 's32[2]{0}', space=sflag, size = 0x8, scoped, tag = 'scoped memory for tpu_custom_call.1']
    #allocation4 [shape = 's32[2]{0}', space=sflag, size = 0x8, scoped, tag = 'scoped memory for tpu_custom_call.1']
    #allocation5 [shape = 'u8[1024]{0}', space=vmem, size = 0x400, scoped, tag = 'input window, operand 1, single buffered']
    #allocation6 [shape = 's32[1]{0}', space=sflag, size = 0x4, scoped, tag = 'scoped memory for tpu_custom_call.1']
    #allocation7 [shape = 'u8[2048]{0}', space=vmem, size = 0x800, scoped, tag = 'output window, operand 0']
    %7 = vsyncpa [#allocation3], 0
    %s8 = scalar_lea.sflag [#allocation3], 1
    %9 = vsyncpa %s8, 0
    %10 = vsyncpa [#allocation6], 0
    %11 = vsyncpa [#allocation4], 0
    %s12 = scalar_lea.sflag [#allocation4], 1
    %13 = vsyncpa %s12, 0
    loop: start=0, step=1, limit=4
    $region2: #{tpu_custom_call.1} parent=1 // loop_pre_header
      _
    $region3: #{tpu_custom_call.1} parent=1 // loop_header
      %s15 = sphi 0, %s19
      %p16 = scmp.ge.s32.totalorder %s15, 4
      %s22 = sphi 0, %s34
      %s23 = sphi 0, %s30
      %s24 = sphi 0, %s22
      %s25 = sphi 0, %s23
      %s26 = sphi 0, %s24
      %s27 = sphi 0, %s25
      %s39 = sphi 0, %s41
      %s42 = sphi 0, %s39
      %s43 = sphi 0, %s42
      %s59 = sphi 0, %s43
      %s65 = sphi 0, %s67
      %s68 = sphi 0, %s65
      %s69 = sphi 0, %s68
      %s85 = sphi 0, %s69
      %s93 = sphi 0, %s95
      %s96 = sphi 0, %s93
      %s97 = sphi 0, %s96
      %s113 = sphi 0, %s97
    $region4: #{tpu_custom_call.1} parent=1 // loop_header_branch
      %18 = sbr.rel (%p16) target = $region8
    $region5: #{tpu_custom_call.1} parent=1 // loop_body
      %s20 = ssub.s32 %s15, 1
      %s21 = ssub.s32 %s15, 2
      %s28 = sadd.s32 1, %s23
      %p29 = scmp.ge.s32.totalorder %s28, 2
      %s30 = scalar_select %p29, 0, %s28
      %s31 = sadd.s32 1, %s22
      %s32 = scalar_select %p29, %s31, %s22
      %p33 = scmp.ge.s32.totalorder %s32, 1
      %s34 = scalar_select %p33, 0, %s32
      %s35 = ssub.s32 %s23, %s30
      %s36 = ssub.s32 %s22, %s34
      %s37 = sor.u32 %s35, %s36
      %p38 = scmp.eq.s32.totalorder %s37, 0
      %s40 = sadd.s32 %s39, 1
      %s41 = scalar_select %p38, %s39, %s40
      %p44 = pneg %p38
      %p45 = scmp.eq.s32.totalorder %s15, 1
      %p46 = por %p44, %p45
      %p47 = scmp.ne.s32.totalorder %s39, %s42
      %p48 = scmp.eq.s32.totalorder %s15, 0
      %p49 = por %p47, %p48
      %p50 = scmp.ne.s32.totalorder %s39, %s42
      %p51 = scmp.eq.s32.totalorder %s20, 1
      %p52 = por %p50, %p51
      %p53 = scmp.ne.s32.totalorder %s42, %s43
      %p54 = scmp.eq.s32.totalorder %s20, 0
      %p55 = por %p53, %p54
      %p56 = scmp.ne.s32.totalorder %s42, %s43
      %p57 = scmp.eq.s32.totalorder %s21, 1
      %p58 = por %p56, %p57
      %p60 = scmp.ne.s32.totalorder %s43, %s59
      %p61 = scmp.eq.s32.totalorder %s21, 0
      %p62 = por %p60, %p61
      %s63 = ssub.s32 %s22, %s34
      %p64 = scmp.eq.s32.totalorder %s63, 0
      %s66 = sadd.s32 %s65, 1
      %s67 = scalar_select %p64, %s65, %s66
      %p70 = pneg %p64
      %p71 = scmp.eq.s32.totalorder %s15, 1
      %p72 = por %p70, %p71
      %p73 = scmp.ne.s32.totalorder %s65, %s68
      %p74 = scmp.eq.s32.totalorder %s15, 0
      %p75 = por %p73, %p74
      %p76 = scmp.ne.s32.totalorder %s65, %s68
      %p77 = scmp.eq.s32.totalorder %s20, 1
      %p78 = por %p76, %p77
      %p79 = scmp.ne.s32.totalorder %s68, %s69
      %p80 = scmp.eq.s32.totalorder %s20, 0
      %p81 = por %p79, %p80
      %p82 = scmp.ne.s32.totalorder %s68, %s69
      %p83 = scmp.eq.s32.totalorder %s21, 1
      %p84 = por %p82, %p83
      %p86 = scmp.ne.s32.totalorder %s69, %s85
      %p87 = scmp.eq.s32.totalorder %s21, 0
      %p88 = por %p86, %p87
      %s89 = ssub.s32 %s23, %s30
      %s90 = ssub.s32 %s22, %s34
      %s91 = sor.u32 %s89, %s90
      %p92 = scmp.eq.s32.totalorder %s91, 0
      %s94 = sadd.s32 %s93, 1
      %s95 = scalar_select %p92, %s93, %s94
      %p98 = pneg %p92
      %p99 = scmp.eq.s32.totalorder %s15, 1
      %p100 = por %p98, %p99
      %p101 = scmp.ne.s32.totalorder %s93, %s96
      %p102 = scmp.eq.s32.totalorder %s15, 0
      %p103 = por %p101, %p102
      %p104 = scmp.ne.s32.totalorder %s93, %s96
      %p105 = scmp.eq.s32.totalorder %s20, 1
      %p106 = por %p104, %p105
      %p107 = scmp.ne.s32.totalorder %s96, %s97
      %p108 = scmp.eq.s32.totalorder %s20, 0
      %p109 = por %p107, %p108
      %p110 = scmp.ne.s32.totalorder %s96, %s97
      %p111 = scmp.eq.s32.totalorder %s21, 1
      %p112 = por %p110, %p111
      %p114 = scmp.ne.s32.totalorder %s97, %s113
      %p115 = scmp.eq.s32.totalorder %s21, 0
      %p116 = por %p114, %p115
      %p117 = scmp.le.s32.totalorder 1, %s15
      %p118 = scmp.lt.s32.totalorder %s15, 3
      %p119 = pnand %p117, %p118
      %p120 = pneg %p119
      // Predicated region
      $region9: #{tpu_custom_call.1} parent=5 // pred_check
        _
      $region10: #{tpu_custom_call.1} parent=5 // pred_check_branch
        %122 = sbr.rel (%p119) target = $region12
      $region11: #{tpu_custom_call.1} parent=5 // pred_region
        %s123 = ssub.s32 %s15, 1
        // Predicated region
        $region13: #{tpu_custom_call.1} parent=11 // pred_check
          %p124 = pneg %p81
        $region14: #{tpu_custom_call.1} parent=11 // pred_check_branch
          %126 = sbr.rel (%p124) target = $region16
        $region15: #{tpu_custom_call.1} parent=11 // pred_region
          %s128 = ssub.s32 32, 32
          %129 = vsyncadd [#allocation6], %s128
          %s130 = smul.addr %s24, 2
          %s131 = smul.addr %s130, 16
          %s132 = scalar_lea.hbm %s1, %s131
          %s134 = sshll.u32 [#allocation5], 4
          %s135 = int_to_ptr.vmem [resolvable:$true] %s134
          %137 = dma.hbm_to_vmem [thread:$0]  %s132, 32, %s135, [#allocation6]
        $region16: #{tpu_custom_call.1} parent=11 // pred_fallthru
          _
      $region12: #{tpu_custom_call.1} parent=5 // pred_fallthru
        _
      %p138 = scmp.lt.s32.totalorder %s15, 2
      // Predicated region
      $region17: #{tpu_custom_call.1} parent=5 // pred_check
        %p139 = pneg %p138
      $region18: #{tpu_custom_call.1} parent=5 // pred_check_branch
        %141 = sbr.rel (%p139) target = $region20
      $region19: #{tpu_custom_call.1} parent=5 // pred_region
        // Predicated region
        $region21: #{tpu_custom_call.1} parent=19 // pred_check
          %p142 = pneg %p49
        $region22: #{tpu_custom_call.1} parent=19 // pred_check_branch
          %144 = sbr.rel (%p142) target = $region24
        $region23: #{tpu_custom_call.1} parent=19 // pred_region
          %s145 = sand.u32 %s39, 1
          %s146 = scalar_lea.sflag [#allocation3], %s145
          %s147 = sand.u32 %s39, 1
          %s148 = smul.addr %s147, 2
          %s149 = scalar_lea.vmem [#allocation2], %s148
          %s151 = ssub.s32 32, 32
          %152 = vsyncadd %s146, %s151
          %s153 = smul.addr %s22, 2
          %s154 = smul.addr %s23, 2
          %s155 = sadd.s32 %s153, %s154
          %s156 = smul.addr %s155, 16
          %s157 = scalar_lea.hbm %s0, %s156
          %s159 = sshll.u32 %s149, 4
          %s160 = int_to_ptr.vmem [resolvable:$true] %s159
          %162 = dma.hbm_to_vmem [thread:$0]  %s157, 32, %s160, %s146
        $region24: #{tpu_custom_call.1} parent=19 // pred_fallthru
          _
      $region20: #{tpu_custom_call.1} parent=5 // pred_fallthru
        _
      %p163 = scmp.le.s32.totalorder 1, %s15
      %p164 = scmp.lt.s32.totalorder %s15, 3
      %p165 = pnand %p163, %p164
      %p166 = pneg %p165
      // Predicated region
      $region25: #{tpu_custom_call.1} parent=5 // pred_check
        _
      $region26: #{tpu_custom_call.1} parent=5 // pred_check_branch
        %168 = sbr.rel (%p165) target = $region28
      $region27: #{tpu_custom_call.1} parent=5 // pred_region
        %s169 = ssub.s32 %s15, 1
        %s170 = sand.u32 %s42, 1
        %s171 = scalar_lea.sflag [#allocation3], %s170
        %s172 = sand.u32 %s42, 1
        %s173 = smul.addr %s172, 2
        %s174 = scalar_lea.vmem [#allocation2], %s173
        // Predicated region
        $region29: #{tpu_custom_call.1} parent=27 // pred_check
          %p175 = pneg %p55
        $region30: #{tpu_custom_call.1} parent=27 // pred_check_branch
          %177 = sbr.rel (%p175) target = $region32
        $region31: #{tpu_custom_call.1} parent=27 // pred_region
          %178 = dma.done %s171, 32
        $region32: #{tpu_custom_call.1} parent=27 // pred_fallthru
          _
        // Predicated region
        $region33: #{tpu_custom_call.1} parent=27 // pred_check
          %p179 = pneg %p81
        $region34: #{tpu_custom_call.1} parent=27 // pred_check_branch
          %181 = sbr.rel (%p179) target = $region36
        $region35: #{tpu_custom_call.1} parent=27 // pred_region
          %182 = dma.done [#allocation6], 32
        $region36: #{tpu_custom_call.1} parent=27 // pred_fallthru
          _
        %s183 = sand.u32 %s42, 1
        %s184 = scalar_lea.sflag [#allocation3], %s183
        %s185 = sand.u32 %s42, 1
        %s186 = smul.addr %s185, 2
        %s187 = scalar_lea.vmem [#allocation2], %s186
        %p188 = pneg %p55
        %p189 = pneg %p52
        %p190 = pneg %p81
        %p191 = pneg %p78
        %p192 = pneg %p109
        %p193 = pneg %p106
        %s194 = sand.u32 %s96, 1
        %s195 = scalar_lea.sflag [#allocation4], %s194
        %s196 = sand.u32 %s96, 1
        %s197 = smul.addr %s196, 2
        %s198 = scalar_lea.vmem [#allocation7], %s197
        %v199 = vld [vmem:[%s174] sm:$0x3]
        %v200 = vld [vmem:[#allocation5] sm:$0x3]
        %v202 = vlaneseq
        %v203 = vshrl.u32 %v202, 7
        %v204 = vsub.s32 0, %v203
        %v205 = vrot.slane %v199, %v204
        %v206 = vlaneseq
        %v207 = vshrl.u32 %v206, 7
        %v208 = vsub.s32 1, %v207
        %v209 = vrot.slane %v199, %v208
        %212 = vrot.lane.b32.xlu0 %v205, 1
        %v213 = vpop.permute.xlu0 %212
        %214 = vrot.lane.b32.xlu0 %v209, 1
        %v215 = vpop.permute.xlu0 %214
        %v216 = vlaneseq
        %v217 = vand.u32 %v216, 127
        %vm218 = vcmp.lt.s32.totalorder %v217, 1
        %v219 = vsel %vm218, %v213, %v215
        %v220 = vsel %vm218, %v215, %v213
        %221 = vrot.lane.b32.xlu0 %v205, 127
        %v222 = vpop.permute.xlu0 %221
        %223 = vrot.lane.b32.xlu0 %v209, 127
        %v224 = vpop.permute.xlu0 %223
        %vm225 = vcmp.lt.s32.totalorder %v217, 127
        %v226 = vsel %vm225, %v222, %v224
        %v227 = vsel %vm225, %v224, %v222
        %v228 = vadd.s32 %v217, 128
        %v229 = vand.u32 %v217, 1
        %v230 = vand.u32 %v228, 1
        %vm231 = vcmp.eq.s32.totalorder %v229, 0
        %vm232 = vcmp.eq.s32.totalorder %v230, 0
        %v233 = vsub.f32 0.0, %v226
        %v234 = vsub.f32 0.0, %v227
        %v235 = vsel %vm231, %v233, %v220
        %v236 = vsel %vm232, %v234, %v219
        %v239 = vcombine.low %v235, %v236
        %v241 = vunpack.c.l.s4 1966171168
        %v242 = vunpack.c.0.s8 %v241
        %v243 = vlaneseq
        %v244 = vshrl.u32 %v243, 7
        %v245 = vsub.s32 %v242, %v244
        %v246 = vrot.slane %v239, %v245
        %v248 = vunpack.c.l.s4 1966171168
        %v249 = vunpack.c.0.s8 %v248
        %v250 = vlaneseq
        %v251 = vshrl.u32 %v250, 7
        %v252 = vsub.s32 %v249, %v251
        %v253 = vrot.slane %v246, %v252
        %v255 = vadd.f32 %v199, %v253
        %v256 = vmul.f32 %v200, %v255
        %v257 = vlaneseq
        %vm258 = vcmp.ge.s32.totalorder %v257, 0
        %vm259 = vcmp.lt.s32.totalorder %v257, 256
        %vm260 = vmand %vm258, %vm259
        %261 = vst.msk [vmem:[%s198] sm:$0x3] %vm260, %v256
        %s262 = sand.u32 %s96, 1
        %s263 = scalar_lea.sflag [#allocation4], %s262
        %s264 = sand.u32 %s96, 1
        %s265 = smul.addr %s264, 2
        %s266 = scalar_lea.vmem [#allocation7], %s265
        // Predicated region
        $region37: #{tpu_custom_call.1} parent=27 // pred_check
          %p267 = pneg %p106
        $region38: #{tpu_custom_call.1} parent=27 // pred_check_branch
          %269 = sbr.rel (%p267) target = $region40
        $region39: #{tpu_custom_call.1} parent=27 // pred_region
          %s271 = ssub.s32 32, 32
          %272 = vsyncadd %s263, %s271
          %s273 = smul.addr %s24, 2
          %s274 = smul.addr %s25, 2
          %s275 = sadd.s32 %s273, %s274
          %s276 = smul.addr %s275, 16
          %s277 = scalar_lea.hbm %s2, %s276
          %s279 = sshll.u32 %s266, 4
          %s280 = int_to_ptr.vmem [resolvable:$true] %s279
          %282 = dma.vmem_to_hbm [thread:$0]  %s280, 32, %s277, %s263
        $region40: #{tpu_custom_call.1} parent=27 // pred_fallthru
          _
      $region28: #{tpu_custom_call.1} parent=5 // pred_fallthru
        _
      %p283 = scmp.le.s32.totalorder 2, %s15
      // Predicated region
      $region41: #{tpu_custom_call.1} parent=5 // pred_check
        %p284 = pneg %p283
      $region42: #{tpu_custom_call.1} parent=5 // pred_check_branch
        %286 = sbr.rel (%p284) target = $region44
      $region43: #{tpu_custom_call.1} parent=5 // pred_region
        %s287 = ssub.s32 %s15, 2
        // Predicated region
        $region45: #{tpu_custom_call.1} parent=43 // pred_check
          %p288 = pneg %p112
        $region46: #{tpu_custom_call.1} parent=43 // pred_check_branch
          %290 = sbr.rel (%p288) target = $region48
        $region47: #{tpu_custom_call.1} parent=43 // pred_region
          %s291 = sand.u32 %s97, 1
          %s292 = scalar_lea.sflag [#allocation4], %s291
          %s293 = sand.u32 %s97, 1
          %s294 = smul.addr %s293, 2
          %s295 = scalar_lea.vmem [#allocation7], %s294
          %296 = dma.done %s292, 32
        $region48: #{tpu_custom_call.1} parent=43 // pred_fallthru
          _
      $region44: #{tpu_custom_call.1} parent=5 // pred_fallthru
        _
    $region6: #{tpu_custom_call.1} parent=1 // loop_footer
      %s19 = sadd.s32 1, %s15
    $region7: #{tpu_custom_call.1} parent=1 // loop_footer_branch
      %14 = sbr.rel target = $region3
    $region8: #{tpu_custom_call.1} parent=1 // loop_exit
      _
    %297 = vsyncpa [#allocation3], 1
    %s298 = scalar_lea.sflag [#allocation3], 1
    %299 = vsyncpa %s298, 1
    %300 = vsyncpa [#allocation6], 1
    %301 = vsyncpa [#allocation4], 1
    %s302 = scalar_lea.sflag [#allocation4], 1
    %303 = vsyncpa %s302, 1

</llo_original>
